<compile_context>
chip_gen: v7x
topology: tpu7x:2x2x1
jax: 0.10.0
libtpu: 0.0.40
codegen_flags: <defaults>
</compile_context>

<pallas_src>
import functools

import jax
import jax.numpy as jnp
from jax.experimental import pallas as pl
from jax.experimental.pallas import tpu as pltpu


def _pick_images_per_step(n):
    # Amortize per-grid-step overhead for large N while keeping >= 2 grid steps so both
    # v7x TensorCores get work (v5e/v6e are single-TC, so this costs nothing there).
    for b in (8, 4, 2):
        if n % b == 0 and n // b >= 2:
            return b
    return 1


@functools.partial(jax.jit, static_argnames=("compute_dtype", "images_per_step"))
def self_attention_forward(x, w_conv, w_att, compute_dtype=jnp.bfloat16,
                           images_per_step=None):
    """x: (N, C, H, W) f32; w_conv/w_att: (O, C, 3, 3) PyTorch OIHW. Returns (N, O, H, W) f32."""
    N, C, H, W = x.shape
    O = w_conv.shape[0]
    L = H * W                          # flattened spatial extent (lane axis); 256 = 2*128 here
    P0 = -(-(W + 1) // 128) * 128      # 128-aligned zero pad >= W+1 on each side of the flat row
    B = images_per_step if images_per_step is not None else _pick_images_per_step(N)
    assert N % B == 0, "images_per_step must divide the batch"
    cdt = compute_dtype

    # Free contiguous reshape — no pad op, no extra HBM traffic.
    xf = x.reshape(N, C, L)

    # Fuse both convs into one (2O, 9C) matrix. Column order = (kh, kw, c), matching the
    # in-kernel slab row order tap*C + c. Rows [0,O) = conv branch, [O,2O) = attention branch.
    w_cat = jnp.concatenate([w_conv, w_att], axis=0)                     # (2O, C, 3, 3)
    w2 = jnp.transpose(w_cat, (0, 2, 3, 1)).reshape(2 * O, 9 * C).astype(cdt)

    def kernel(x_ref, w_ref, o_ref):
        # x_ref: (B, C, L) f32   w_ref: (2O, 9C) cdt   o_ref: (B, O, L) f32
        # Hoisted loop invariants (JAX does not CSE broadcasts).
        col = jax.lax.broadcasted_iota(jnp.int32, (1, L), 1) % W
        not_left = jnp.broadcast_to(col != 0, (C, L))          # kw=0 taps invalid at w == 0
        not_right = jnp.broadcast_to(col != (W - 1), (C, L))   # kw=2 taps invalid at w == W-1
        zpad = jnp.zeros((C, P0), cdt)
        w_mat = w_ref[...]                                     # (2O, 9C), tiny, resident

        for bi in range(B):                                    # small static unroll
            xi = x_ref[bi].astype(cdt)                         # (C, L) raw image row
            xp = jnp.concatenate([zpad, xi, zpad], axis=1)     # (C, 2*P0 + L) zero-padded row
            pieces = []
            for kh in range(3):                                # 9 static taps
                for kw in range(3):
                    s = P0 + (kh - 1) * W + (kw - 1)           # static lane offset
                    v = xp[:, s:s + L]                         # shifted view (vertical spill
                    if kw == 0:                                #  lands in the zero pads)
                        v = jnp.where(not_left, v, jnp.zeros_like(v))
                    elif kw == 2:
                        v = jnp.where(not_right, v, jnp.zeros_like(v))
                    pieces.append(v)
            slab = jnp.concatenate(pieces, axis=0)             # (9C, L)
            acc = jnp.dot(w_mat, slab, preferred_element_type=jnp.float32)   # (2O, L) f32
            gated = acc[:O, :] * jax.nn.sigmoid(acc[O:, :])    # f32 gate epilogue (VPU/EUP)
            o_ref[bi] = gated.astype(o_ref.dtype)              # lane-dense, unmasked store

    out_flat = pl.pallas_call(
        kernel,
        out_shape=jax.ShapeDtypeStruct((N, O, L), jnp.float32),
        grid_spec=pltpu.PrefetchScalarGridSpec(
            num_scalar_prefetch=0,
            grid=(N // B,),
            in_specs=[
                pl.BlockSpec((B, C, L), lambda n: (n, 0, 0)),       # B raw images / step
                pl.BlockSpec((2 * O, 9 * C), lambda n: (0, 0)),     # fused weights (resident)
            ],
            out_specs=pl.BlockSpec((B, O, L), lambda n: (n, 0, 0)),
        ),
        compiler_params=pltpu.CompilerParams(
            dimension_semantics=("parallel",),
        ),
    )(xf, w2)

    # Free contiguous reshape back to NCHW — no slice, no junk columns.
    return out_flat.reshape(N, O, H, W)


def _reference(x, w_conv, w_att):
    dn = ("NCHW", "OIHW", "NCHW")
    feat = jax.lax.conv_general_dilated(x, w_conv, (1, 1), "SAME", dimension_numbers=dn)
    att = jax.lax.conv_general_dilated(x, w_att, (1, 1), "SAME", dimension_numbers=dn)
    return feat * jax.nn.sigmoid(att)


if __name__ == "__main__":
    in_channels, out_channels = 4, 8
    N, H, W = 2, 16, 16

    key = jax.random.PRNGKey(0)
    kx, kc, ka = jax.random.split(key, 3)
    x = jax.random.normal(kx, (N, in_channels, H, W), dtype=jnp.float32)

    fan_in = in_channels * 3 * 3
    bound = 1.0 / (fan_in ** 0.5)
    w_conv = jax.random.uniform(kc, (out_channels, in_channels, 3, 3),
                                jnp.float32, -bound, bound)
    # Module __init__ zeroes the attention conv weight (gate == 0.5 everywhere at init).
    w_att_init = jnp.zeros((out_channels, in_channels, 3, 3), jnp.float32)
    # Nonzero attention weight ("trained") to exercise the gate / fused-weight path.
    w_att_nz = jax.random.uniform(ka, (out_channels, in_channels, 3, 3),
                                  jnp.float32, -bound, bound)

    # 1) Exact module semantics (zero-initialized attention weight), f32 matmuls.
    out = jax.block_until_ready(
        self_attention_forward(x, w_conv, w_att_init, compute_dtype=jnp.float32))
    ref = _reference(x, w_conv, w_att_init)
    assert out.shape == (N, out_channels, H, W)
    assert jnp.allclose(out, ref, atol=1e-5, rtol=1e-5), "mismatch (zero attention weight)"

    # 2) Nonzero attention weight (validates fused weights, masks and the sigmoid gate), f32.
    out2 = jax.block_until_ready(
        self_attention_forward(x, w_conv, w_att_nz, compute_dtype=jnp.float32))
    ref2 = _reference(x, w_conv, w_att_nz)
    assert jnp.allclose(out2, ref2, atol=1e-5, rtol=1e-5), "mismatch (nonzero attention weight)"

    # 3) Default bf16 matmul-input path (native MXU dtype); accumulation + elementwise are f32.
    out3 = jax.block_until_ready(self_attention_forward(x, w_conv, w_att_nz))
    assert jnp.allclose(out3, ref2, atol=5e-2, rtol=5e-2), "mismatch (bf16 matmul path)"

    print("KERNEL_OK")
</pallas_src>

<mosaic_0001>
module attributes {stable_mosaic.version = 11 : i64} {
  func.func @kernel(%arg0: i32, %arg1: memref<1x4x256xf32, #tpu.memory_space<vmem>>, %arg2: memref<16x36xf32, #tpu.memory_space<vmem>>, %arg3: memref<1x8x256xf32, #tpu.memory_space<vmem>>) attributes {dimension_semantics = [#tpu.dimension_semantics<parallel>], iteration_bounds = array<i64: 2>, scalar_prefetch = 0 : i64, scratch_operands = 0 : i64, tpu.core_type = #tpu.core_type<tc>, window_params = [{transform_indices = @transform_0, window_bounds = array<i64: 1, 4, 256>}, {pipeline_mode = #tpu.pipeline_mode<synchronous>, transform_indices = @transform_1, window_bounds = array<i64: 16, 36>}, {transform_indices = @transform_2, window_bounds = array<i64: 1, 8, 256>}]} {
    %0 = tpu.iota {dimensions = array<i32: 1>} : vector<1x256xi32>
    %c16_i32 = arith.constant 16 : i32
    %c0_i32 = arith.constant 0 : i32
    %1 = arith.cmpi eq, %c16_i32, %c0_i32 : i32
    %c1_i32 = arith.constant 1 : i32
    %2 = arith.select %1, %c1_i32, %c16_i32 : i32
    %3 = vector.broadcast %2 : i32 to vector<1x256xi32>
    %4 = arith.remsi %0, %3 : vector<1x256xi32>
    %c0_i32_0 = arith.constant 0 : i32
    %5 = vector.broadcast %c0_i32_0 : i32 to vector<1x256xi32>
    %6 = arith.cmpi ne, %4, %5 : vector<1x256xi32>
    %c0_i32_1 = arith.constant 0 : i32
    %7 = vector.broadcast %c0_i32_1 : i32 to vector<1x256xi32>
    %8 = arith.cmpi slt, %4, %7 : vector<1x256xi32>
    %c0_i32_2 = arith.constant 0 : i32
    %9 = arith.cmpi slt, %2, %c0_i32_2 : i32
    %10 = vector.broadcast %9 : i1 to vector<1x256xi1>
    %11 = vector.broadcast %10 : vector<1x256xi1> to vector<1x256xi1>
    %12 = arith.xori %8, %11 : vector<1x256xi1>
    %13 = arith.andi %12, %6 : vector<1x256xi1>
    %14 = vector.broadcast %2 : i32 to vector<1x256xi32>
    %15 = arith.addi %4, %14 : vector<1x256xi32>
    %16 = arith.select %13, %15, %4 : vector<1x256xi1>, vector<1x256xi32>
    %c0_i32_3 = arith.constant 0 : i32
    %17 = vector.broadcast %c0_i32_3 : i32 to vector<1x256xi32>
    %18 = arith.cmpi ne, %16, %17 : vector<1x256xi32>
    %19 = vector.shape_cast %18 : vector<1x256xi1> to vector<1x256xi1>
    %20 = vector.broadcast %19 : vector<1x256xi1> to vector<4x256xi1>
    %c15_i32 = arith.constant 15 : i32
    %21 = vector.broadcast %c15_i32 : i32 to vector<1x256xi32>
    %22 = arith.cmpi ne, %16, %21 : vector<1x256xi32>
    %23 = vector.shape_cast %22 : vector<1x256xi1> to vector<1x256xi1>
    %24 = vector.broadcast %23 : vector<1x256xi1> to vector<4x256xi1>
    %cst = arith.constant 0.000000e+00 : f32
    %25 = vector.broadcast %cst : f32 to vector<4x128xf32>
    %c0 = arith.constant 0 : index
    %c0_4 = arith.constant 0 : index
    %26 = vector.load %arg2[%c0, %c0_4] : memref<16x36xf32, #tpu.memory_space<vmem>>, vector<16x36xf32>
    %c0_5 = arith.constant 0 : index
    %c0_6 = arith.constant 0 : index
    %c0_7 = arith.constant 0 : index
    %27 = vector.load %arg1[%c0_5, %c0_6, %c0_7] : memref<1x4x256xf32, #tpu.memory_space<vmem>>, vector<1x4x256xf32>
    %28 = vector.shape_cast %27 : vector<1x4x256xf32> to vector<4x256xf32>
    %29 = tpu.concatenate %25, %28, %25 in 1 : vector<4x128xf32>, vector<4x256xf32>, vector<4x128xf32> -> vector<4x512xf32>
    %30 = vector.extract_strided_slice %29 {offsets = [0, 111], sizes = [4, 256], strides = [1, 1]} : vector<4x512xf32> to vector<4x256xf32>
    %cst_8 = arith.constant 0.000000e+00 : f32
    %31 = vector.broadcast %cst_8 : f32 to vector<4x256xf32>
    %32 = arith.select %20, %30, %31 : vector<4x256xi1>, vector<4x256xf32>
    %33 = vector.extract_strided_slice %29 {offsets = [0, 112], sizes = [4, 256], strides = [1, 1]} : vector<4x512xf32> to vector<4x256xf32>
    %34 = vector.extract_strided_slice %29 {offsets = [0, 113], sizes = [4, 256], strides = [1, 1]} : vector<4x512xf32> to vector<4x256xf32>
    %cst_9 = arith.constant 0.000000e+00 : f32
    %35 = vector.broadcast %cst_9 : f32 to vector<4x256xf32>
    %36 = arith.select %24, %34, %35 : vector<4x256xi1>, vector<4x256xf32>
    %37 = vector.extract_strided_slice %29 {offsets = [0, 127], sizes = [4, 256], strides = [1, 1]} : vector<4x512xf32> to vector<4x256xf32>
    %cst_10 = arith.constant 0.000000e+00 : f32
    %38 = vector.broadcast %cst_10 : f32 to vector<4x256xf32>
    %39 = arith.select %20, %37, %38 : vector<4x256xi1>, vector<4x256xf32>
    %40 = vector.extract_strided_slice %29 {offsets = [0, 128], sizes = [4, 256], strides = [1, 1]} : vector<4x512xf32> to vector<4x256xf32>
    %41 = vector.extract_strided_slice %29 {offsets = [0, 129], sizes = [4, 256], strides = [1, 1]} : vector<4x512xf32> to vector<4x256xf32>
    %cst_11 = arith.constant 0.000000e+00 : f32
    %42 = vector.broadcast %cst_11 : f32 to vector<4x256xf32>
    %43 = arith.select %24, %41, %42 : vector<4x256xi1>, vector<4x256xf32>
    %44 = vector.extract_strided_slice %29 {offsets = [0, 143], sizes = [4, 256], strides = [1, 1]} : vector<4x512xf32> to vector<4x256xf32>
    %cst_12 = arith.constant 0.000000e+00 : f32
    %45 = vector.broadcast %cst_12 : f32 to vector<4x256xf32>
    %46 = arith.select %20, %44, %45 : vector<4x256xi1>, vector<4x256xf32>
    %47 = vector.extract_strided_slice %29 {offsets = [0, 144], sizes = [4, 256], strides = [1, 1]} : vector<4x512xf32> to vector<4x256xf32>
    %48 = vector.extract_strided_slice %29 {offsets = [0, 145], sizes = [4, 256], strides = [1, 1]} : vector<4x512xf32> to vector<4x256xf32>
    %cst_13 = arith.constant 0.000000e+00 : f32
    %49 = vector.broadcast %cst_13 : f32 to vector<4x256xf32>
    %50 = arith.select %24, %48, %49 : vector<4x256xi1>, vector<4x256xf32>
    %51 = tpu.concatenate %32, %33, %36, %39, %40, %43, %46, %47, %50 in 0 : vector<4x256xf32>, vector<4x256xf32>, vector<4x256xf32>, vector<4x256xf32>, vector<4x256xf32>, vector<4x256xf32>, vector<4x256xf32>, vector<4x256xf32>, vector<4x256xf32> -> vector<36x256xf32>
    %cst_14 = arith.constant dense<0.000000e+00> : vector<16x256xf32>
    %52 = tpu.matmul %26, %51, %cst_14 {dimension_numbers = #tpu.dot_dimension_numbers<[1], [0], [0], [1], [0, 0, 1, 1], [], []>} : vector<16x36xf32>, vector<36x256xf32>, vector<16x256xf32> -> vector<16x256xf32>
    %53 = vector.extract_strided_slice %52 {offsets = [0, 0], sizes = [8, 256], strides = [1, 1]} : vector<16x256xf32> to vector<8x256xf32>
    %54 = vector.extract_strided_slice %52 {offsets = [8, 0], sizes = [8, 256], strides = [1, 1]} : vector<16x256xf32> to vector<8x256xf32>
    %55 = arith.negf %54 : vector<8x256xf32>
    %56 = math.exp %55 : vector<8x256xf32>
    %cst_15 = arith.constant 1.000000e+00 : f32
    %57 = vector.broadcast %cst_15 : f32 to vector<8x256xf32>
    %58 = arith.addf %57, %56 : vector<8x256xf32>
    %59 = arith.divf %57, %58 : vector<8x256xf32>
    %60 = arith.mulf %53, %59 : vector<8x256xf32>
    %c0_16 = arith.constant 0 : index
    %c0_17 = arith.constant 0 : index
    %c0_18 = arith.constant 0 : index
    %61 = vector.load %arg3[%c0_16, %c0_17, %c0_18] : memref<1x8x256xf32, #tpu.memory_space<vmem>>, vector<1x8x256xf32>
    %62 = vector.shape_cast %61 : vector<1x8x256xf32> to vector<8x256xf32>
    %63 = vector.shape_cast %60 : vector<8x256xf32> to vector<1x8x256xf32>
    tpu.vector_store %arg3[%c0_16, %c0_17, %c0_18], %63 {strides = array<i32>} : memref<1x8x256xf32, #tpu.memory_space<vmem>>, vector<1x8x256xf32>,
    return
  }
  func.func @transform_0(%arg0: i32) -> (i32, i32, i32) {
    %c0_i32 = arith.constant 0 : i32
    %c0_i32_0 = arith.constant 0 : i32
    %c0_i32_1 = arith.constant 0 : i32
    return %arg0, %c0_i32, %c0_i32_0 : i32, i32, i32
  }
  func.func @transform_1(%arg0: i32) -> (i32, i32) {
    %c0_i32 = arith.constant 0 : i32
    %c0_i32_0 = arith.constant 0 : i32
    %c0_i32_1 = arith.constant 0 : i32
    return %c0_i32, %c0_i32_0 : i32, i32
  }
  func.func @transform_2(%arg0: i32) -> (i32, i32, i32) {
    %c0_i32 = arith.constant 0 : i32
    %c0_i32_0 = arith.constant 0 : i32
    %c0_i32_1 = arith.constant 0 : i32
    return %arg0, %c0_i32, %c0_i32_0 : i32, i32, i32
  }
}

</mosaic_0001>

<llo_original>
// kernel: self_attention_forward.1
$region0: #{self_attention_forward.1}
  #allocation0 [shape = 'u32[]', space=smem, size = 0x4, offset = 0x4, fixed_abs, tag = 'smem constant byte address 0x4 - core index']
  #allocation1 [shape = 'u32[144,128]{1,0:T(1,128)}', space=vmem, size = 0x12000, scoped, tag = 'internal scratch']
  %s0 = inlined_call_operand.vmem [shape: f32[2,4,256], index: 0, kind: input, shape index: {}]
  %s1 = inlined_call_operand.vmem [shape: f32[16,36], index: 1, kind: input, shape index: {}]
  %s2 = inlined_call_operand.vmem [shape: f32[2,8,256], index: 2, kind: output, shape index: {}]
  %s3 = sld [smem:[#allocation0]]
  $region41: #{self_attention_forward.1} parent=0
    _
  %s5 = ssub.s32 1, %s3
  %s6 = scalar_select 0, %s5, %s3
  loop: start=0, step=1, limit=4
  $region2: #{self_attention_forward.1} parent=0 // loop_pre_header
    _
  $region3: #{self_attention_forward.1} parent=0 // loop_header
    %s8 = sphi 0, %s12
    %p9 = scmp.ge.s32.totalorder %s8, 4
    %s18 = sphi 0, %s20
    %s21 = sphi 0, %s18
    %s22 = sphi 0, %s21
    %s38 = sphi 0, %s22
    %s42 = sphi 0, %s42
    %s44 = sphi 0, %s42
    %s45 = sphi 0, %s44
    %s59 = sphi 0, %s45
    %s65 = sphi 0, %s67
    %s68 = sphi 0, %s65
    %s69 = sphi 0, %s68
    %s85 = sphi 0, %s69
  $region4: #{self_attention_forward.1} parent=0 // loop_header_branch
    %11 = sbr.rel (%p9) target = $region8
  $region5: #{self_attention_forward.1} parent=0 // loop_body
    %s13 = ssub.s32 %s8, 1
    %s14 = ssub.s32 %s8, 2
    %s15 = sadd.s32 %s8, 1
    %s16 = ssub.s32 %s8, %s15
    %p17 = scmp.eq.s32.totalorder %s16, 0
    %s19 = sadd.s32 %s18, 1
    %s20 = scalar_select %p17, %s18, %s19
    %p23 = pneg %p17
    %p24 = scmp.eq.s32.totalorder %s8, 1
    %p25 = por %p23, %p24
    %p26 = scmp.ne.s32.totalorder %s18, %s21
    %p27 = scmp.eq.s32.totalorder %s8, 0
    %p28 = por %p26, %p27
    %p29 = scmp.ne.s32.totalorder %s18, %s21
    %p30 = scmp.eq.s32.totalorder %s13, 1
    %p31 = por %p29, %p30
    %p32 = scmp.ne.s32.totalorder %s21, %s22
    %p33 = scmp.eq.s32.totalorder %s13, 0
    %p34 = por %p32, %p33
    %p35 = scmp.ne.s32.totalorder %s21, %s22
    %p36 = scmp.eq.s32.totalorder %s14, 1
    %p37 = por %p35, %p36
    %p39 = scmp.ne.s32.totalorder %s22, %s38
    %p40 = scmp.eq.s32.totalorder %s14, 0
    %p41 = por %p39, %p40
    %s43 = sadd.s32 %s42, 1
    %p46 = scmp.eq.s32.totalorder %s8, 1
    %p47 = scmp.ne.s32.totalorder %s42, %s44
    %p48 = scmp.eq.s32.totalorder %s8, 0
    %p49 = por %p47, %p48
    %p50 = scmp.ne.s32.totalorder %s42, %s44
    %p51 = scmp.eq.s32.totalorder %s13, 1
    %p52 = por %p50, %p51
    %p53 = scmp.ne.s32.totalorder %s44, %s45
    %p54 = scmp.eq.s32.totalorder %s13, 0
    %p55 = por %p53, %p54
    %p56 = scmp.ne.s32.totalorder %s44, %s45
    %p57 = scmp.eq.s32.totalorder %s14, 1
    %p58 = por %p56, %p57
    %p60 = scmp.ne.s32.totalorder %s45, %s59
    %p61 = scmp.eq.s32.totalorder %s14, 0
    %p62 = por %p60, %p61
    %s63 = ssub.s32 %s8, %s15
    %p64 = scmp.eq.s32.totalorder %s63, 0
    %s66 = sadd.s32 %s65, 1
    %s67 = scalar_select %p64, %s65, %s66
    %p70 = pneg %p64
    %p71 = scmp.eq.s32.totalorder %s8, 1
    %p72 = por %p70, %p71
    %p73 = scmp.ne.s32.totalorder %s65, %s68
    %p74 = scmp.eq.s32.totalorder %s8, 0
    %p75 = por %p73, %p74
    %p76 = scmp.ne.s32.totalorder %s65, %s68
    %p77 = scmp.eq.s32.totalorder %s13, 1
    %p78 = por %p76, %p77
    %p79 = scmp.ne.s32.totalorder %s68, %s69
    %p80 = scmp.eq.s32.totalorder %s13, 0
    %p81 = por %p79, %p80
    %p82 = scmp.ne.s32.totalorder %s68, %s69
    %p83 = scmp.eq.s32.totalorder %s14, 1
    %p84 = por %p82, %p83
    %p86 = scmp.ne.s32.totalorder %s69, %s85
    %p87 = scmp.eq.s32.totalorder %s14, 0
    %p88 = por %p86, %p87
    %p89 = scmp.le.s32.totalorder 1, %s8
    %p90 = scmp.lt.s32.totalorder %s8, 3
    %p91 = pnand %p89, %p90
    %p92 = pneg %p91
    // Predicated region
    $region9: #{self_attention_forward.1} parent=5 // pred_check
      _
    $region10: #{self_attention_forward.1} parent=5 // pred_check_branch
      %94 = sbr.rel (%p91) target = $region12
    $region11: #{self_attention_forward.1} parent=5 // pred_region
      %s95 = ssub.s32 %s8, 1
      // Predicated region
      $region13: #{self_attention_forward.1} parent=11 // pred_check
        %p96 = pneg %p55
      $region14: #{self_attention_forward.1} parent=11 // pred_check_branch
        %98 = sbr.rel (%p96) target = $region16
      $region15: #{self_attention_forward.1} parent=11 // pred_region
        _
      $region16: #{self_attention_forward.1} parent=11 // pred_fallthru
        _
    $region12: #{self_attention_forward.1} parent=5 // pred_fallthru
      _
    %p99 = scmp.lt.s32.totalorder %s8, 2
    // Predicated region
    $region17: #{self_attention_forward.1} parent=5 // pred_check
      %p100 = pneg %p99
    $region18: #{self_attention_forward.1} parent=5 // pred_check_branch
      %102 = sbr.rel (%p100) target = $region20
    $region19: #{self_attention_forward.1} parent=5 // pred_region
      // Predicated region
      $region21: #{self_attention_forward.1} parent=19 // pred_check
        %p103 = pneg %p28
      $region22: #{self_attention_forward.1} parent=19 // pred_check_branch
        %105 = sbr.rel (%p103) target = $region24
      $region23: #{self_attention_forward.1} parent=19 // pred_region
        %p106 = scmp.lt.s32.totalorder %s8, 1
        %s107 = scalar_select %p106, %s8, 1
        %s108 = smul.addr %s107, 2
        %s109 = smul.addr %s108, 4
        %s110 = scalar_lea.vmem %s0, %s109
      $region24: #{self_attention_forward.1} parent=19 // pred_fallthru
        _
    $region20: #{self_attention_forward.1} parent=5 // pred_fallthru
      _
    %p111 = scmp.le.s32.totalorder 1, %s8
    %p112 = scmp.lt.s32.totalorder %s8, 3
    %p113 = pnand %p111, %p112
    %p114 = pneg %p113
    // Predicated region
    $region25: #{self_attention_forward.1} parent=5 // pred_check
      _
    $region26: #{self_attention_forward.1} parent=5 // pred_check_branch
      %116 = sbr.rel (%p113) target = $region28
    $region27: #{self_attention_forward.1} parent=5 // pred_region
      %s117 = ssub.s32 %s8, 1
      %p118 = scmp.lt.s32.totalorder %s13, 1
      %s119 = scalar_select %p118, %s13, 1
      %s120 = smul.addr %s119, 2
      %s121 = smul.addr %s120, 4
      %s122 = scalar_lea.vmem %s0, %s121
      %p123 = pneg %p34
      %p124 = pneg %p31
      %p125 = pneg %p55
      %p126 = pneg %p52
      %p127 = pneg %p81
      %p128 = pneg %p78
      %p129 = scmp.lt.s32.totalorder %s13, 1
      %s130 = scalar_select %p129, %s13, 1
      %s131 = smul.addr %s130, 2
      %s132 = smul.addr %s131, 8
      %s133 = scalar_lea.vmem %s2, %s132
      %p134 = scmp.lt.s32.totalorder %s13, 1
      %s135 = scalar_select %p134, %s13, 1
      %s136 = smul.addr %s135, 2
      %s137 = smul.addr %s136, 4
      %s138 = scalar_lea.vmem %s0, %s137
      %p139 = scmp.lt.s32.totalorder %s13, 1
      %s140 = scalar_select %p139, %s13, 1
      %s141 = smul.addr %s140, 2
      %s142 = smul.addr %s141, 8
      %s143 = scalar_lea.vmem %s2, %s142
      %v144 = vlaneseq
      %v145 = vand.u32 %v144, 127
      %v146 = vadd.s32 %v145, 128
      %vm147 = vcmp.lt.s32.totalorder %v145, 0
      %v148 = vsub.s32 0, %v145
      %v149 = vsel %vm147, %v148, %v145
      %v150 = vshrl.u32 %v149, 4
      %v151 = vand.u32 %v149, 15
      %v152 = vsub.s32 0, %v151
      %v153 = vsel %vm147, %v152, %v151
      %vm154 = vcmp.lt.s32.totalorder %v146, 0
      %v155 = vsub.s32 0, %v146
      %v156 = vsel %vm154, %v155, %v146
      %v157 = vshrl.u32 %v156, 4
      %v158 = vand.u32 %v156, 15
      %v159 = vsub.s32 0, %v158
      %v160 = vsel %vm154, %v159, %v158
      %vm161 = vcmp.ne.s32.totalorder %v153, 0
      %vm162 = vcmp.ne.s32.totalorder %v160, 0
      %vm163 = vcmp.lt.s32.totalorder %v153, 0
      %vm164 = vcmp.lt.s32.totalorder %v160, 0
      %vm165 = vmand %vm163, %vm161
      %vm166 = vmand %vm164, %vm162
      %v167 = vadd.s32 %v153, 16
      %v168 = vadd.s32 %v160, 16
      %v169 = vsel %vm165, %v167, %v153
      %v170 = vsel %vm166, %v168, %v160
      %vm171 = vcmp.ne.s32.totalorder %v169, 0
      %vm172 = vcmp.ne.s32.totalorder %v170, 0
      %v173 = vsel %vm171, 1, 0
      %v174 = vsel %vm172, 1, 0
      %vm175 = vcmp.eq.s32.totalorder %v173, 1
      %vm176 = vcmp.eq.s32.totalorder %v174, 1
      %vm177 = vcmp.ne.s32.totalorder %v169, 15
      %vm178 = vcmp.ne.s32.totalorder %v170, 15
      %v179 = vsel %vm177, 1, 0
      %v180 = vsel %vm178, 1, 0
      %vm181 = vcmp.eq.s32.totalorder %v179, 1
      %vm182 = vcmp.eq.s32.totalorder %v180, 1
      %v183 = vld [vmem:[%s1] sm:$0xff]
      %v184 = vld [vmem:[%s1 + $0x8] sm:$0xff]
      %v185 = vld [vmem:[%s138] sm:$0xff]
      %v187 = vcombine.high %v185, %v185
      %190 = vrot.lane.b32.xlu0 0.0, 17
      %v191 = vpop.permute.xlu0 %190
      %192 = vrot.lane.b32.xlu0 %v185, 17
      %v193 = vpop.permute.xlu0 %192
      %194 = vrot.lane.b32.xlu0 %v187, 17
      %v195 = vpop.permute.xlu0 %194
      %vm196 = vcmask 138240
      %v197 = vsel %vm196, %v191, %v193
      %v198 = vsel %vm196, %v193, %v195
      %v201 = vsel %vm175, %v197, 0.0
      %v202 = vsel %vm176, %v198, 0.0
      %203 = vrot.lane.b32.xlu0 0.0, 15
      %v204 = vpop.permute.xlu0 %203
      %205 = vrot.lane.b32.xlu0 %v185, 15
      %v206 = vpop.permute.xlu0 %205
      %207 = vrot.lane.b32.xlu0 %v187, 15
      %v208 = vpop.permute.xlu0 %207
      %vm209 = vcmask 121856
      %v210 = vsel %vm209, %v204, %v206
      %v211 = vsel %vm209, %v206, %v208
      %v214 = vsel %vm181, %v210, 0.0
      %v215 = vsel %vm182, %v211, 0.0
      %216 = vrot.lane.b32.xlu0 0.0, 1
      %v217 = vpop.permute.xlu0 %216
      %218 = vrot.lane.b32.xlu0 %v185, 1
      %v219 = vpop.permute.xlu0 %218
      %220 = vrot.lane.b32.xlu0 %v187, 1
      %v221 = vpop.permute.xlu0 %220
      %vm222 = vcmask 7168
      %v223 = vsel %vm222, %v217, %v219
      %v224 = vsel %vm222, %v219, %v221
      %v227 = vsel %vm175, %v223, 0.0
      %v228 = vsel %vm176, %v224, 0.0
      %229 = vrot.lane.b32.xlu0 %v185, 127
      %v230 = vpop.permute.xlu0 %229
      %231 = vrot.lane.b32.xlu0 %v187, 127
      %v232 = vpop.permute.xlu0 %231
      %233 = vrot.lane.b32.xlu0 0.0, 127
      %v234 = vpop.permute.xlu0 %233
      %vm235 = vcmask 1039360
      %v236 = vsel %vm235, %v230, %v232
      %v237 = vsel %vm235, %v232, %v234
      %v240 = vsel %vm181, %v236, 0.0
      %v241 = vsel %vm182, %v237, 0.0
      %242 = vrot.lane.b32.xlu0 %v185, 113
      %v243 = vpop.permute.xlu0 %242
      %244 = vrot.lane.b32.xlu0 %v187, 113
      %v245 = vpop.permute.xlu0 %244
      %246 = vrot.lane.b32.xlu0 0.0, 113
      %v247 = vpop.permute.xlu0 %246
      %vm248 = vcmask 924672
      %v249 = vsel %vm248, %v243, %v245
      %v250 = vsel %vm248, %v245, %v247
      %v253 = vsel %vm175, %v249, 0.0
      %v254 = vsel %vm176, %v250, 0.0
      %255 = vrot.lane.b32.xlu0 %v185, 111
      %v256 = vpop.permute.xlu0 %255
      %257 = vrot.lane.b32.xlu0 %v187, 111
      %v258 = vpop.permute.xlu0 %257
      %259 = vrot.lane.b32.xlu0 0.0, 111
      %v260 = vpop.permute.xlu0 %259
      %vm261 = vcmask 908288
      %v262 = vsel %vm261, %v256, %v258
      %v263 = vsel %vm261, %v258, %v260
      %v266 = vsel %vm181, %v262, 0.0
      %v267 = vsel %vm182, %v263, 0.0
      %v268 = vrot.slane 0.0, 4
      %v269 = vrot.slane %v185, 4
      %v270 = vrot.slane %v187, 4
      %271 = vrot.lane.b32.xlu0 %v268, 16
      %v272 = vpop.permute.xlu0 %271
      %273 = vrot.lane.b32.xlu0 %v269, 16
      %v274 = vpop.permute.xlu0 %273
      %275 = vrot.lane.b32.xlu0 %v270, 16
      %v276 = vpop.permute.xlu0 %275
      %vm277 = vcmask 130048
      %v278 = vsel %vm277, %v272, %v274
      %v279 = vsel %vm277, %v274, %v276
      %v284 = vrot.slane %v227, 4
      %v285 = vrot.slane %v228, 4
      %v290 = vrot.slane %v240, 4
      %v291 = vrot.slane %v241, 4
      %294 = vrot.lane.b32.xlu0 %v269, 112
      %v295 = vpop.permute.xlu0 %294
      %296 = vrot.lane.b32.xlu0 %v270, 112
      %v297 = vpop.permute.xlu0 %296
      %298 = vrot.lane.b32.xlu0 %v268, 112
      %v299 = vpop.permute.xlu0 %298
      %vm300 = vcmask 916480
      %v301 = vsel %vm300, %v295, %v297
      %v302 = vsel %vm300, %v297, %v299
      %vm305 = vcmask 1043456
      %v306 = vsel %vm305, %v201, %v278
      %v307 = vsel %vm305, %v202, %v279
      %v308 = vsel %vm305, %v214, %v284
      %v309 = vsel %vm305, %v215, %v285
      %v310 = vsel %vm305, %v185, %v290
      %v311 = vsel %vm305, %v187, %v291
      %v312 = vsel %vm305, %v253, %v301
      %v313 = vsel %vm305, %v254, %v302
      %vm314 = vcmask 293888
      %v316 = vsel %vm314, %v183, 0
      %v319 = vsel %vm314, %v184, 0
      %v322 = vsel %vm305, %v266, 0
      %v325 = vsel %vm305, %v267, 0
      %327 = vmatprep.subr.mxu0 %v307
      %328 = vmatpush1.msra.mxu0 %v306
      %329 = vmatprep.subr.mxu0 %v309
      %330 = vmatpush1.msra.mxu0 %v308
      %331 = vmatprep.subr.mxu0 %v311
      %332 = vmatpush1.msra.mxu0 %v310
      %333 = vmatprep.subr.mxu0 %v313
      %334 = vmatpush1.msra.mxu0 %v312
      %335 = vmatprep.subr.mxu0 %v325
      %336 = vmatpush1.msra.mxu0 %v322
      %337 = vmatprep.subr.mxu0 0.0
      %338 = vmatpush1.msra.mxu0 0.0
      %339 = vmatprep.subr.mxu0 0.0
      %340 = vmatpush1.msra.mxu0 0.0
      %341 = vmatprep.subr.mxu0 0.0
      %342 = vmatpush1.msra.mxu0 0.0
      %343 = vmatprep.subr.mxu0 0.0
      %344 = vmatpush1.msra.mxu0 0.0
      %345 = vmatprep.subr.mxu0 0.0
      %346 = vmatpush1.msra.mxu0 0.0
      %347 = vmatprep.subr.mxu0 0.0
      %348 = vmatpush1.msra.mxu0 0.0
      %349 = vmatprep.subr.mxu0 0.0
      %350 = vmatpush1.msra.mxu0 0.0
      %351 = vmatprep.subr.mxu0 0.0
      %352 = vmatpush1.msra.mxu0 0.0
      %353 = vmatprep.subr.mxu0 0.0
      %354 = vmatpush1.msra.mxu0 0.0
      %355 = vmatprep.subr.mxu0 0.0
      %356 = vmatpush1.msra.mxu0 0.0
      %357 = vmatprep.subr.mxu0 0.0
      %358 = vmatpush1.msra.mxu0 0.0
      %359 = vmatprep.subr.mxu0 0.0
      %360 = vmatpush1.msra.mxu0 0.0
      %361 = vmatprep.subr.mxu0 0.0
      %362 = vmatpush1.msra.mxu0 0.0
      %363 = vmatprep.subr.mxu0 0.0
      %364 = vmatpush1.msra.mxu0 0.0
      %365 = vmatprep.subr.mxu0 0.0
      %366 = vmatpush1.msra.mxu0 0.0
      %367 = vmatprep.subr.mxu0 0.0
      %368 = vmatpush1.msra.mxu0 0.0
      %369 = vmatprep.subr.mxu0 0.0
      %370 = vmatpush1.msra.mxu0 0.0
      %371 = vmatprep.subr.mxu0 0.0
      %372 = vmatpush1.msra.mxu0 0.0
      %373 = vmatprep.subr.mxu0 0.0
      %374 = vmatpush1.msra.mxu0 0.0
      %375 = vmatprep.subr.mxu0 0.0
      %376 = vmatpush1.msra.mxu0 0.0
      %377 = vmatprep.subr.mxu0 0.0
      %378 = vmatpush1.msra.mxu0 0.0
      %379 = vmatprep.subr.mxu0 0.0
      %380 = vmatpush1.msra.mxu0 0.0
      %381 = vmatprep.subr.mxu0 0.0
      %382 = vmatpush1.msra.mxu0 0.0
      %383 = vmatprep.subr.mxu0 0.0
      %384 = vmatpush1.msra.mxu0 0.0
      %385 = vmatprep.subr.mxu0 0.0
      %386 = vmatpush1.msra.mxu0 0.0
      %387 = vmatprep.subr.mxu0 0.0
      %388 = vmatpush1.msra.mxu0 0.0
      %389 = vmatprep.subr.mxu0 0.0
      %390 = vmatpush1.msra.mxu0 0.0
      %391 = vmatprep.mubr.f32.mxu0 0.0
      %392 = vmatmul.mubr.f32.gmra.mrb[0].mxu0 %v316
      %v393 = vpop.f32.mrb[0].mxu0
      %v394 = vadd.f32 0.0, %v393
      %v395 = vpop.f32.mrb[0].mxu0
      %v396 = vadd.f32 0.0, %v395
      %397 = vmatprep.mubr.f32.mxu0 0.0
      %398 = vmatmul.mubr.f32.gmra.mrb[0].mxu0 %v319
      %v399 = vpop.f32.mrb[0].mxu0
      %v400 = vadd.f32 0.0, %v399
      %v401 = vpop.f32.mrb[0].mxu0
      %v402 = vadd.f32 0.0, %v401
      %403 = vdwg.mxu0
      %v404 = vxor.u32 %v400, 2147483648
      %v405 = vxor.u32 %v402, 2147483648
      %v406 = vmul.f32 %v404, 1.442695
      %v407 = vpow.pop %v406
      %v408 = vmul.f32 %v405, 1.442695
      %v409 = vpow.pop %v408
      %v410 = vadd.f32 %v407, 1.0
      %v411 = vadd.f32 %v409, 1.0
      %v412 = vrcp.pop %v410
      %v413 = vmul.f32 1.0, %v412
      %v414 = vrcp.pop %v411
      %v415 = vmul.f32 1.0, %v414
      %v416 = vmul.f32 %v394, %v413
      %v417 = vmul.f32 %v396, %v415
      %418 = vst [vmem:[%s143] sm:$0xff] %v416
      %419 = vst [vmem:[%s143 + $0x8] sm:$0xff] %v417
      %p420 = scmp.lt.s32.totalorder %s13, 1
      %s421 = scalar_select %p420, %s13, 1
      %s422 = smul.addr %s421, 2
      %s423 = smul.addr %s422, 8
      %s424 = scalar_lea.vmem %s2, %s423
      // Predicated region
      $region29: #{self_attention_forward.1} parent=27 // pred_check
        %p425 = pneg %p78
      $region30: #{self_attention_forward.1} parent=27 // pred_check_branch
        %427 = sbr.rel (%p425) target = $region32
      $region31: #{self_attention_forward.1} parent=27 // pred_region
        _
      $region32: #{self_attention_forward.1} parent=27 // pred_fallthru
        _
    $region28: #{self_attention_forward.1} parent=5 // pred_fallthru
      _
    %p428 = scmp.le.s32.totalorder 2, %s8
    // Predicated region
    $region33: #{self_attention_forward.1} parent=5 // pred_check
      %p429 = pneg %p428
    $region34: #{self_attention_forward.1} parent=5 // pred_check_branch
      %431 = sbr.rel (%p429) target = $region36
    $region35: #{self_attention_forward.1} parent=5 // pred_region
      %s432 = ssub.s32 %s8, 2
      // Predicated region
      $region37: #{self_attention_forward.1} parent=35 // pred_check
        %p433 = pneg %p84
      $region38: #{self_attention_forward.1} parent=35 // pred_check_branch
        %435 = sbr.rel (%p433) target = $region40
      $region39: #{self_attention_forward.1} parent=35 // pred_region
        %p436 = scmp.lt.s32.totalorder %s14, 1
        %s437 = scalar_select %p436, %s14, 1
        %s438 = smul.addr %s437, 2
        %s439 = smul.addr %s438, 8
        %s440 = scalar_lea.vmem %s2, %s439
      $region40: #{self_attention_forward.1} parent=35 // pred_fallthru
        _
    $region36: #{self_attention_forward.1} parent=5 // pred_fallthru
      _
  $region6: #{self_attention_forward.1} parent=0 // loop_footer
    %s12 = sadd.s32 1, %s8
  $region7: #{self_attention_forward.1} parent=0 // loop_footer_branch
    %7 = sbr.rel target = $region3
  $region8: #{self_attention_forward.1} parent=0 // loop_exit
    _

</llo_original>
